<compile_context>
chip_gen: v7x
topology: tpu7x:2x2x1
jax: 0.10.0
libtpu: 0.0.40
codegen_flags: <defaults>
</compile_context>

<pallas_src>
import jax
import jax.numpy as jnp
from jax.experimental import pallas as pl
from jax.experimental.pallas import tpu as pltpu


_LANE = 128       # vreg lane width
_SUBLANE = 8      # vreg sublane count (f32)
_MXU_MIN_K = 128  # below this contraction width, use the VPU for the cross term


def _round_up(x, m):
    return ((x + m - 1) // m) * m


def _cross_term(f_ref, ct_ref):
    """f @ ct with M on the lane axis. VPU path for tiny D, MXU otherwise."""
    f = f_ref[...]
    D = f.shape[1]
    if D < _MXU_MIN_K:
        # D unrolled broadcast-multiply-adds on the VPU: with K this small the
        # MXU matmul would be padded to its native 128/256 contraction width.
        f32 = f.astype(jnp.float32)
        ct = ct_ref[...].astype(jnp.float32)
        cross = f32[:, 0:1] * ct[0:1, :]
        for d in range(1, D):
            cross = cross + f32[:, d:d + 1] * ct[d:d + 1, :]
        return cross
    # Native-dtype MXU contraction with f32 accumulation; ct is already (D, M)
    # so there is no transpose inside the kernel.
    return jnp.dot(f, ct_ref[...], preferred_element_type=jnp.float32)


def _dist_l2_kernel(f_ref, ct_ref, c2_ref, o_ref):
    # f: (TN, D), ct: (D, Mpad), c2: (1, Mpad)  ->  o: (TN, Mpad) squared L2.
    f32 = f_ref[...].astype(jnp.float32)
    f2 = jnp.sum(f32 * f32, axis=1, keepdims=True)           # (TN, 1)
    cross = _cross_term(f_ref, ct_ref)                        # (TN, Mpad)
    o_ref[...] = f2 - 2.0 * cross + c2_ref[...]


def _dist_dot_kernel(f_ref, ct_ref, o_ref):
    # metric != 'l2' branch: plain inner-product similarity.
    o_ref[...] = _cross_term(f_ref, ct_ref)


def _pairwise_pallas(features, centers_mat, metric='l2', tile_n=512):
    """(N, D) x (M, D) -> (N, M) pairwise sq-L2 distance (or dot similarity)."""
    N, D = features.shape
    M, Dc = centers_mat.shape
    assert D == Dc, (D, Dc)

    # Lane-dense output: pad the class/center axis to a multiple of 128.
    Mpad = _round_up(M, _LANE)
    # Batch tile: sublane-aligned, capped so double-buffered in/out tiles stay
    # comfortably inside VMEM even on v7x (64 MiB physical per TC).
    TN = min(tile_n, _round_up(N, _SUBLANE))
    Npad = _round_up(N, TN)

    f = features
    if Npad != N:
        f = jnp.pad(f, ((0, Npad - N), (0, 0)))

    # Pre-transpose centers once in the wrapper -> (D, Mpad).
    ct = jnp.transpose(centers_mat)
    if Mpad != M:
        ct = jnp.pad(ct, ((0, 0), (0, Mpad - M)))

    grid = (Npad // TN,)

    # Explicit VMEM budget derived from the (double-buffered) tiles.
    tile_bytes = 4 * 2 * (TN * D + D * Mpad + Mpad + TN * Mpad)
    vmem_limit = int(min(max(4 * tile_bytes, 16 * 1024 * 1024),
                         64 * 1024 * 1024))
    cparams = pltpu.CompilerParams(
        dimension_semantics=("parallel",),
        vmem_limit_bytes=vmem_limit,
    )

    if metric == 'l2':
        # Squared norms of the centers, computed once (reused by every N tile).
        c2 = jnp.sum(ct.astype(jnp.float32) ** 2, axis=0, keepdims=True)  # (1, Mpad)
        out = pl.pallas_call(
            _dist_l2_kernel,
            out_shape=jax.ShapeDtypeStruct((Npad, Mpad), jnp.float32),
            grid=grid,
            in_specs=[
                pl.BlockSpec((TN, D), lambda i: (i, 0)),      # features tile
                pl.BlockSpec((D, Mpad), lambda i: (0, 0)),    # centers^T (resident)
                pl.BlockSpec((1, Mpad), lambda i: (0, 0)),    # ||c||^2 row
            ],
            out_specs=pl.BlockSpec((TN, Mpad), lambda i: (i, 0)),
            compiler_params=cparams,
        )(f, ct, c2)
    else:
        out = pl.pallas_call(
            _dist_dot_kernel,
            out_shape=jax.ShapeDtypeStruct((Npad, Mpad), jnp.float32),
            grid=grid,
            in_specs=[
                pl.BlockSpec((TN, D), lambda i: (i, 0)),
                pl.BlockSpec((D, Mpad), lambda i: (0, 0)),
            ],
            out_specs=pl.BlockSpec((TN, Mpad), lambda i: (i, 0)),
            compiler_params=cparams,
        )(f, ct)

    return out[:N, :M]


class Dist:
    """JAX/Pallas port of the APF Dist module (forward semantics preserved)."""

    def __init__(self, num_classes=11, num_centers=1, feat_dim=2,
                 init='random', key=None):
        self.feat_dim = feat_dim
        self.num_classes = num_classes
        self.num_centers = num_centers
        if init == 'random':
            if key is None:
                key = jax.random.PRNGKey(42)
            self.centers = 0.1 * jax.random.normal(
                key, (num_classes * num_centers, feat_dim), dtype=jnp.float32)
        elif init == 'fix':
            # Matches the torch module: eye(num_classes, num_classes); only
            # shape-consistent when feat_dim == num_classes and num_centers == 1.
            self.centers = jnp.eye(num_classes, dtype=jnp.float32)
        else:
            self.centers = jnp.zeros(
                (num_classes * num_centers, feat_dim), dtype=jnp.float32)

    def forward(self, features, center=None, metric='l2'):
        cen = self.centers if center is None else center
        dist = _pairwise_pallas(features, cen, metric=metric)
        if dist.shape[1] == self.num_classes:
            dist = jnp.reshape(dist, (-1, self.num_classes, self.num_centers))
        else:
            dist = jnp.reshape(dist, (-1, self.num_classes + 1, self.num_centers))
        dist = jnp.mean(dist, axis=2)
        return dist

    __call__ = forward


def _reference_l2(features, centers, num_classes, num_centers):
    f2 = jnp.sum(features ** 2, axis=1, keepdims=True)
    c2 = jnp.sum(centers ** 2, axis=1, keepdims=True)
    dist = f2 - 2.0 * features @ centers.T + c2.T
    dist = dist.reshape(-1, num_classes, num_centers)
    return jnp.mean(dist, axis=2)


def _reference_dot(features, centers, num_classes, num_centers):
    dist = features @ centers.T
    dist = dist.reshape(-1, num_classes, num_centers)
    return jnp.mean(dist, axis=2)


if __name__ == "__main__":
    num_classes, num_centers, feat_dim = 11, 1, 2
    batch = 8

    key = jax.random.PRNGKey(0)
    k_feat, k_cent = jax.random.split(key)
    features = jax.random.normal(k_feat, (batch, feat_dim), dtype=jnp.float32)

    dist_mod = Dist(num_classes=num_classes, num_centers=num_centers,
                    feat_dim=feat_dim, init='random', key=k_cent)

    out_l2 = jax.block_until_ready(dist_mod(features, metric='l2'))
    out_dot = jax.block_until_ready(dist_mod(features, metric='dot'))

    ref_l2 = _reference_l2(features, dist_mod.centers, num_classes, num_centers)
    ref_dot = _reference_dot(features, dist_mod.centers, num_classes, num_centers)

    assert out_l2.shape == (batch, num_classes), out_l2.shape
    assert out_dot.shape == (batch, num_classes), out_dot.shape
    assert jnp.allclose(out_l2, ref_l2, atol=1e-4, rtol=1e-4), \
        "Pallas L2 result differs from reference"
    assert jnp.allclose(out_dot, ref_dot, atol=1e-4, rtol=1e-4), \
        "Pallas dot result differs from reference"

    print("KERNEL_OK")
</pallas_src>

<mosaic_0001>
module attributes {stable_mosaic.version = 11 : i64} {
  func.func @_dist_l2_kernel(%arg0: i32, %arg1: memref<8x2xf32, #tpu.memory_space<vmem>>, %arg2: memref<2x128xf32, #tpu.memory_space<vmem>>, %arg3: memref<1x128xf32, #tpu.memory_space<vmem>>, %arg4: memref<8x128xf32, #tpu.memory_space<vmem>>) attributes {dimension_semantics = [#tpu.dimension_semantics<parallel>], iteration_bounds = array<i64: 1>, scalar_prefetch = 0 : i64, scratch_operands = 0 : i64, tpu.core_type = #tpu.core_type<tc>, window_params = [{transform_indices = @transform_0, window_bounds = array<i64: 8, 2>}, {pipeline_mode = #tpu.pipeline_mode<synchronous>, transform_indices = @transform_1, window_bounds = array<i64: 2, 128>}, {pipeline_mode = #tpu.pipeline_mode<synchronous>, transform_indices = @transform_2, window_bounds = array<i64: 1, 128>}, {transform_indices = @transform_3, window_bounds = array<i64: 8, 128>}]} {
    %c0 = arith.constant 0 : index
    %c0_0 = arith.constant 0 : index
    %0 = vector.load %arg1[%c0, %c0_0] : memref<8x2xf32, #tpu.memory_space<vmem>>, vector<8x2xf32>
    %1 = arith.mulf %0, %0 : vector<8x2xf32>
    %cst = arith.constant dense<0.000000e+00> : vector<8xf32>
    %2 = vector.multi_reduction <add>, %1, %cst [1] : vector<8x2xf32> to vector<8xf32>
    %3 = vector.shape_cast %2 : vector<8xf32> to vector<8x1xf32>
    %c0_1 = arith.constant 0 : index
    %c0_2 = arith.constant 0 : index
    %4 = vector.load %arg1[%c0_1, %c0_2] : memref<8x2xf32, #tpu.memory_space<vmem>>, vector<8x2xf32>
    %c0_3 = arith.constant 0 : index
    %c0_4 = arith.constant 0 : index
    %5 = vector.load %arg2[%c0_3, %c0_4] : memref<2x128xf32, #tpu.memory_space<vmem>>, vector<2x128xf32>
    %6 = vector.extract_strided_slice %4 {offsets = [0, 0], sizes = [8, 1], strides = [1, 1]} : vector<8x2xf32> to vector<8x1xf32>
    %7 = vector.extract_strided_slice %5 {offsets = [0, 0], sizes = [1, 128], strides = [1, 1]} : vector<2x128xf32> to vector<1x128xf32>
    %8 = vector.broadcast %6 : vector<8x1xf32> to vector<8x128xf32>
    %9 = vector.broadcast %7 : vector<1x128xf32> to vector<8x128xf32>
    %10 = arith.mulf %8, %9 : vector<8x128xf32>
    %11 = vector.extract_strided_slice %4 {offsets = [0, 1], sizes = [8, 1], strides = [1, 1]} : vector<8x2xf32> to vector<8x1xf32>
    %12 = vector.extract_strided_slice %5 {offsets = [1, 0], sizes = [1, 128], strides = [1, 1]} : vector<2x128xf32> to vector<1x128xf32>
    %13 = vector.broadcast %11 : vector<8x1xf32> to vector<8x128xf32>
    %14 = vector.broadcast %12 : vector<1x128xf32> to vector<8x128xf32>
    %15 = arith.mulf %13, %14 : vector<8x128xf32>
    %16 = arith.addf %10, %15 : vector<8x128xf32>
    %cst_5 = arith.constant 2.000000e+00 : f32
    %17 = vector.broadcast %cst_5 : f32 to vector<8x128xf32>
    %18 = arith.mulf %17, %16 : vector<8x128xf32>
    %19 = vector.broadcast %3 : vector<8x1xf32> to vector<8x128xf32>
    %20 = arith.subf %19, %18 : vector<8x128xf32>
    %c0_6 = arith.constant 0 : index
    %c0_7 = arith.constant 0 : index
    %21 = vector.load %arg3[%c0_6, %c0_7] : memref<1x128xf32, #tpu.memory_space<vmem>>, vector<1x128xf32>
    %22 = vector.broadcast %21 : vector<1x128xf32> to vector<8x128xf32>
    %23 = arith.addf %20, %22 : vector<8x128xf32>
    %c0_8 = arith.constant 0 : index
    %c0_9 = arith.constant 0 : index
    %24 = vector.load %arg4[%c0_8, %c0_9] : memref<8x128xf32, #tpu.memory_space<vmem>>, vector<8x128xf32>
    tpu.vector_store %arg4[%c0_8, %c0_9], %23 {strides = array<i32>} : memref<8x128xf32, #tpu.memory_space<vmem>>, vector<8x128xf32>,
    return
  }
  func.func @transform_0(%arg0: i32) -> (i32, i32) {
    %c0_i32 = arith.constant 0 : i32
    %c0_i32_0 = arith.constant 0 : i32
    return %arg0, %c0_i32 : i32, i32
  }
  func.func @transform_1(%arg0: i32) -> (i32, i32) {
    %c0_i32 = arith.constant 0 : i32
    %c0_i32_0 = arith.constant 0 : i32
    %c0_i32_1 = arith.constant 0 : i32
    return %c0_i32, %c0_i32_0 : i32, i32
  }
  func.func @transform_2(%arg0: i32) -> (i32, i32) {
    %c0_i32 = arith.constant 0 : i32
    %c0_i32_0 = arith.constant 0 : i32
    %c0_i32_1 = arith.constant 0 : i32
    return %c0_i32, %c0_i32_0 : i32, i32
  }
  func.func @transform_3(%arg0: i32) -> (i32, i32) {
    %c0_i32 = arith.constant 0 : i32
    %c0_i32_0 = arith.constant 0 : i32
    return %arg0, %c0_i32 : i32, i32
  }
}

</mosaic_0001>

<llo_original>
// kernel: tpu_custom_call.1
$region0: #{tpu_custom_call.1}
  #allocation0 [shape = 'u32[]', space=smem, size = 0x4, offset = 0x4, fixed_abs, tag = 'smem constant byte address 0x4 - core index']
  #allocation1 [shape = 'u32[144,128]{1,0:T(1,128)}', space=vmem, size = 0x12000, scoped, tag = 'internal scratch']
  %s0 = inlined_call_operand.vmem [shape: f32[8,2], index: 0, kind: input, shape index: {}]
  %s1 = inlined_call_operand.vmem [shape: f32[2,128], index: 1, kind: input, shape index: {}]
  %s2 = inlined_call_operand.vmem [shape: f32[1,128], index: 2, kind: input, shape index: {}]
  %s3 = inlined_call_operand.hbm [shape: f32[8,128], index: 3, kind: output, shape index: {}]
  %s4 = sld [smem:[#allocation0]]
  $region22: #{tpu_custom_call.1} parent=0
    _
  %s6 = ssub.s32 1, %s4
  %s7 = scalar_select 0, %s6, %s4
  $region1: #{tpu_custom_call.1} parent=0
    #allocation2 [shape = 'u8[4096]{0}', space=vmem, size = 0x1000, scoped, tag = 'output window, operand 0, single buffered']
    #allocation3 [shape = 's32[1]{0}', space=sflag, size = 0x4, scoped, tag = 'scoped memory for tpu_custom_call.1']
    %8 = vsyncpa [#allocation3], 0
    // Predicated region
    $region2: #{tpu_custom_call.1} parent=1 // pred_check
      _
    $region3: #{tpu_custom_call.1} parent=1 // pred_check_branch
      %10 = sbr.rel (0) target = $region5
    $region4: #{tpu_custom_call.1} parent=1 // pred_region
      _
    $region5: #{tpu_custom_call.1} parent=1 // pred_fallthru
      _
    // Predicated region
    $region6: #{tpu_custom_call.1} parent=1 // pred_check
      _
    $region7: #{tpu_custom_call.1} parent=1 // pred_check_branch
      %12 = sbr.rel (0) target = $region9
    $region8: #{tpu_custom_call.1} parent=1 // pred_region
      _
    $region9: #{tpu_custom_call.1} parent=1 // pred_fallthru
      _
    // Predicated region
    $region10: #{tpu_custom_call.1} parent=1 // pred_check
      _
    $region11: #{tpu_custom_call.1} parent=1 // pred_check_branch
      %14 = sbr.rel (0) target = $region13
    $region12: #{tpu_custom_call.1} parent=1 // pred_region
      _
    $region13: #{tpu_custom_call.1} parent=1 // pred_fallthru
      _
    %v15 = vld [vmem:[%s0] sm:$0xff]
    %v16 = vmul.f32 %v15, %v15
    %vm17 = vcmask 15360
    %v18 = vsel %vm17, %v16, 0.0
    %19 = vadd.xlane.f32.xlu0 %v18
    %v20 = vpop.xlane.xlu0 %19
    %v21 = vld [vmem:[%s1] sm:$0x3]
    %23 = vset.pattern.permute.xlu0 0
    %24 = vperm.xlu0 %23, %v15
    %v25 = vpop.permute.xlu0 %24
    %v27 = vlaneseq
    %v28 = vshrl.u32 %v27, 7
    %v29 = vsub.s32 0, %v28
    %v30 = vrot.slane %v21, %v29
    %v31 = vmul.f32 %v25, %v30
    %32 = vset.pattern.permute.xlu0 1
    %33 = vperm.xlu0 %32, %v15
    %v34 = vpop.permute.xlu0 %33
    %v36 = vlaneseq
    %v37 = vshrl.u32 %v36, 7
    %v38 = vsub.s32 1, %v37
    %v39 = vrot.slane %v21, %v38
    %v40 = vmul.f32 %v34, %v39
    %v41 = vadd.f32 %v31, %v40
    %v42 = vmul.f32 %v41, 2.0
    %v43 = vsub.f32 %v20, %v42
    %v44 = vld [vmem:[%s2] sm:$0x1]
    %v46 = vlaneseq
    %v47 = vshrl.u32 %v46, 7
    %v48 = vsub.s32 0, %v47
    %v49 = vrot.slane %v44, %v48
    %v51 = vadd.f32 %v43, %v49
    %52 = vst [vmem:[#allocation2] sm:$0xff] %v51
    // Predicated region
    $region14: #{tpu_custom_call.1} parent=1 // pred_check
      _
    $region15: #{tpu_custom_call.1} parent=1 // pred_check_branch
      %54 = sbr.rel (0) target = $region17
    $region16: #{tpu_custom_call.1} parent=1 // pred_region
      %s56 = ssub.s32 128, 128
      %57 = vsyncadd [#allocation3], %s56
      %s59 = sshll.u32 [#allocation2], 4
      %s60 = int_to_ptr.vmem [resolvable:$true] %s59
      %62 = dma.vmem_to_hbm [thread:$0]  %s60, 128, %s3, [#allocation3]
    $region17: #{tpu_custom_call.1} parent=1 // pred_fallthru
      _
    // Predicated region
    $region18: #{tpu_custom_call.1} parent=1 // pred_check
      _
    $region19: #{tpu_custom_call.1} parent=1 // pred_check_branch
      %64 = sbr.rel (0) target = $region21
    $region20: #{tpu_custom_call.1} parent=1 // pred_region
      %65 = dma.done [#allocation3], 128
    $region21: #{tpu_custom_call.1} parent=1 // pred_fallthru
      _
    %66 = vsyncpa [#allocation3], 1

</llo_original>
